<compile_context>
chip_gen: v5e
topology: v5e:2x2
jax: 0.10.0
libtpu: 0.0.40
codegen_flags: <defaults>
</compile_context>

<pallas_src>
import functools

import jax
import jax.numpy as jnp
from jax.experimental import pallas as pl
from jax.experimental.pallas import tpu as pltpu


def _norm_kernel(x_ref, w_ref, b_ref, o_ref, *, eps):
    x = x_ref[...].astype(jnp.float32)                 # (tm, H)
    n = x.shape[-1]

    # One pass: sum(x) and sum(x*x) are independent XLU reductions.
    sum_x = jnp.sum(x, axis=-1, keepdims=True)          # (tm, 1)
    sum_x2 = jnp.sum(x * x, axis=-1, keepdims=True)     # (tm, 1)
    mean = sum_x * (1.0 / n)
    # torch.Tensor.std defaults to the unbiased estimator (divide by N-1).
    var = (sum_x2 - sum_x * mean) / float(n - 1)
    var = jnp.maximum(var, 0.0)                          # guard tiny negative rounding
    std = jnp.sqrt(var)                                  # (tm, 1)

    xc = x - mean
    w = w_ref[...].astype(jnp.float32)                   # (1, H)
    b = b_ref[...].astype(jnp.float32)                   # (1, H)
    denom = std + eps + b                                # broadcasts to (tm, H)
    out = (w * xc) / denom
    o_ref[...] = out.astype(o_ref.dtype)


def _choose_row_tile(rows, H, dtype):
    """Largest sublane-aligned row tile with ~2 MiB per (tm, H) buffer."""
    itemsize = jnp.dtype(dtype).itemsize
    sublane = max(8, 32 // max(1, itemsize))     # 8 f32, 16 bf16, 32 int8
    target_bytes = 2 << 20                       # ~2 MiB per buffer
    tm = target_bytes // max(1, H * itemsize)
    tm = max(sublane, (tm // sublane) * sublane)
    tm = min(tm, 1024)

    rows_padded = ((rows + sublane - 1) // sublane) * sublane
    tm = min(tm, rows_padded)
    # Prefer >= 2 grid steps so the parallel row axis can split across the two
    # TensorCores on v7x (and pipelining actually overlaps DMA with compute).
    if rows_padded > sublane and pl.cdiv(rows, tm) < 2:
        tm = max(sublane, ((rows_padded // 2) // sublane) * sublane)
    return tm


def norm_layer(x, weight, bias, eps=1e-6, *, row_tile=None):
    """x: (..., H); weight, bias: (H,). Returns same shape/dtype as x."""
    orig_shape = x.shape
    H = orig_shape[-1]
    rows = 1
    for d in orig_shape[:-1]:
        rows *= d
    x2 = x.reshape(rows, H)
    w2 = weight.reshape(1, H)
    b2 = bias.reshape(1, H)

    tm = row_tile if row_tile is not None else _choose_row_tile(rows, H, x.dtype)
    grid = (pl.cdiv(rows, tm),)

    # VMEM budget: double-buffered input + output tiles plus tiny param tiles.
    itemsize = jnp.dtype(x.dtype).itemsize
    tile_bytes = tm * H * itemsize
    needed = 2 * 2 * tile_bytes + 4 * H * 4 + (1 << 20)
    vmem_limit = int(min(64 << 20, max(32 << 20, 2 * needed)))

    kernel = functools.partial(_norm_kernel, eps=float(eps))

    out = pl.pallas_call(
        kernel,
        out_shape=jax.ShapeDtypeStruct((rows, H), x.dtype),
        grid_spec=pltpu.PrefetchScalarGridSpec(
            num_scalar_prefetch=0,
            grid=grid,
            in_specs=[
                pl.BlockSpec((tm, H), lambda i: (i, 0)),
                pl.BlockSpec((1, H), lambda i: (0, 0)),
                pl.BlockSpec((1, H), lambda i: (0, 0)),
            ],
            out_specs=pl.BlockSpec((tm, H), lambda i: (i, 0)),
        ),
        compiler_params=pltpu.CompilerParams(
            dimension_semantics=("parallel",),
            vmem_limit_bytes=vmem_limit,
        ),
    )(x2, w2, b2)
    return out.reshape(orig_shape)


def _ref(x, weight, bias, eps=1e-6):
    x32 = x.astype(jnp.float32)
    mean = jnp.mean(x32, axis=-1, keepdims=True)
    xc = x32 - mean
    var = jnp.sum(xc * xc, axis=-1, keepdims=True) / (x.shape[-1] - 1)
    std = jnp.sqrt(var)
    return (weight * xc / (std + eps + bias)).astype(x.dtype)


if __name__ == "__main__":
    B, S, H = 2, 8, 32
    key = jax.random.PRNGKey(0)
    x = jax.random.normal(key, (B, S, H), dtype=jnp.float32)

    # Deterministic parameter init, matching NormLayer.__init__ (norm_shape = H)
    weight = jnp.ones((H,), dtype=jnp.float32)
    bias = jnp.zeros((H,), dtype=jnp.float32)

    out = norm_layer(x, weight, bias, eps=1e-6)
    out = jax.block_until_ready(out)

    ref = _ref(x, weight, bias, eps=1e-6)
    assert out.shape == x.shape and out.dtype == x.dtype
    assert jnp.allclose(out, ref, atol=1e-5, rtol=1e-5)

    print("KERNEL_OK")
</pallas_src>

<mosaic_0001>
module attributes {stable_mosaic.version = 11 : i64} {
  func.func @_norm_kernel(%arg0: i32, %arg1: memref<8x32xf32, #tpu.memory_space<vmem>>, %arg2: memref<1x32xf32, #tpu.memory_space<vmem>>, %arg3: memref<1x32xf32, #tpu.memory_space<vmem>>, %arg4: memref<8x32xf32, #tpu.memory_space<vmem>>) attributes {dimension_semantics = [#tpu.dimension_semantics<parallel>], iteration_bounds = array<i64: 2>, scalar_prefetch = 0 : i64, scratch_operands = 0 : i64, tpu.core_type = #tpu.core_type<tc>, window_params = [{transform_indices = @transform_0, window_bounds = array<i64: 8, 32>}, {pipeline_mode = #tpu.pipeline_mode<synchronous>, transform_indices = @transform_1, window_bounds = array<i64: 1, 32>}, {pipeline_mode = #tpu.pipeline_mode<synchronous>, transform_indices = @transform_2, window_bounds = array<i64: 1, 32>}, {transform_indices = @transform_3, window_bounds = array<i64: 8, 32>}]} {
    %c0 = arith.constant 0 : index
    %c0_0 = arith.constant 0 : index
    %0 = vector.load %arg1[%c0, %c0_0] : memref<8x32xf32, #tpu.memory_space<vmem>>, vector<8x32xf32>
    %cst = arith.constant dense<0.000000e+00> : vector<8xf32>
    %1 = vector.multi_reduction <add>, %0, %cst [1] : vector<8x32xf32> to vector<8xf32>
    %2 = vector.shape_cast %1 : vector<8xf32> to vector<8x1xf32>
    %3 = arith.mulf %0, %0 : vector<8x32xf32>
    %cst_1 = arith.constant dense<0.000000e+00> : vector<8xf32>
    %4 = vector.multi_reduction <add>, %3, %cst_1 [1] : vector<8x32xf32> to vector<8xf32>
    %5 = vector.shape_cast %4 : vector<8xf32> to vector<8x1xf32>
    %cst_2 = arith.constant 3.125000e-02 : f32
    %6 = vector.broadcast %cst_2 : f32 to vector<8x1xf32>
    %7 = arith.mulf %2, %6 : vector<8x1xf32>
    %8 = arith.mulf %2, %7 : vector<8x1xf32>
    %9 = arith.subf %5, %8 : vector<8x1xf32>
    %cst_3 = arith.constant 3.100000e+01 : f32
    %10 = vector.broadcast %cst_3 : f32 to vector<8x1xf32>
    %11 = arith.divf %9, %10 : vector<8x1xf32>
    %cst_4 = arith.constant 0.000000e+00 : f32
    %12 = vector.broadcast %cst_4 : f32 to vector<8x1xf32>
    %13 = arith.maximumf %11, %12 : vector<8x1xf32>
    %14 = math.sqrt %13 : vector<8x1xf32>
    %15 = vector.broadcast %7 : vector<8x1xf32> to vector<8x32xf32>
    %16 = arith.subf %0, %15 : vector<8x32xf32>
    %c0_5 = arith.constant 0 : index
    %c0_6 = arith.constant 0 : index
    %17 = vector.load %arg2[%c0_5, %c0_6] : memref<1x32xf32, #tpu.memory_space<vmem>>, vector<1x32xf32>
    %c0_7 = arith.constant 0 : index
    %c0_8 = arith.constant 0 : index
    %18 = vector.load %arg3[%c0_7, %c0_8] : memref<1x32xf32, #tpu.memory_space<vmem>>, vector<1x32xf32>
    %cst_9 = arith.constant 9.99999997E-7 : f32
    %19 = vector.broadcast %cst_9 : f32 to vector<8x1xf32>
    %20 = arith.addf %14, %19 : vector<8x1xf32>
    %21 = vector.broadcast %20 : vector<8x1xf32> to vector<8x32xf32>
    %22 = vector.broadcast %18 : vector<1x32xf32> to vector<8x32xf32>
    %23 = arith.addf %21, %22 : vector<8x32xf32>
    %24 = vector.broadcast %17 : vector<1x32xf32> to vector<8x32xf32>
    %25 = arith.mulf %24, %16 : vector<8x32xf32>
    %26 = arith.divf %25, %23 : vector<8x32xf32>
    %c0_10 = arith.constant 0 : index
    %c0_11 = arith.constant 0 : index
    %27 = vector.load %arg4[%c0_10, %c0_11] : memref<8x32xf32, #tpu.memory_space<vmem>>, vector<8x32xf32>
    tpu.vector_store %arg4[%c0_10, %c0_11], %26 {strides = array<i32>} : memref<8x32xf32, #tpu.memory_space<vmem>>, vector<8x32xf32>,
    return
  }
  func.func @transform_0(%arg0: i32) -> (i32, i32) {
    %c0_i32 = arith.constant 0 : i32
    %c0_i32_0 = arith.constant 0 : i32
    return %arg0, %c0_i32 : i32, i32
  }
  func.func @transform_1(%arg0: i32) -> (i32, i32) {
    %c0_i32 = arith.constant 0 : i32
    %c0_i32_0 = arith.constant 0 : i32
    %c0_i32_1 = arith.constant 0 : i32
    return %c0_i32, %c0_i32_0 : i32, i32
  }
  func.func @transform_2(%arg0: i32) -> (i32, i32) {
    %c0_i32 = arith.constant 0 : i32
    %c0_i32_0 = arith.constant 0 : i32
    %c0_i32_1 = arith.constant 0 : i32
    return %c0_i32, %c0_i32_0 : i32, i32
  }
  func.func @transform_3(%arg0: i32) -> (i32, i32) {
    %c0_i32 = arith.constant 0 : i32
    %c0_i32_0 = arith.constant 0 : i32
    return %arg0, %c0_i32 : i32, i32
  }
}

</mosaic_0001>

<llo_original>
// kernel: tpu_custom_call.1
$region0: #{tpu_custom_call.1}
  #allocation0 [shape = 'u32[]', space=smem, size = 0x4, offset = 0x4, fixed_abs, tag = 'smem constant byte address 0x4 - core index']
  #allocation1 [shape = 'u32[72,128]{1,0:T(1,128)}', space=vmem, size = 0x9000, scoped, tag = 'internal scratch']
  %s0 = inlined_call_operand.hbm [shape: f32[16,32], index: 0, kind: input, shape index: {}]
  %s1 = inlined_call_operand.hbm [shape: f32[1,32], index: 1, kind: input, shape index: {}]
  %s2 = inlined_call_operand.vmem [shape: f32[1,32], index: 2, kind: input, shape index: {}]
  %s3 = inlined_call_operand.hbm [shape: f32[16,32], index: 3, kind: output, shape index: {}]
  %s4 = sld [smem:[#allocation0]]
  $region53: #{tpu_custom_call.1} parent=0
    _
  %s6 = ssub.s32 1, %s4
  %s7 = scalar_select 0, %s6, %s4
  $region1: #{tpu_custom_call.1} parent=0
    #allocation2 [shape = 'u8[8192]{0}', space=vmem, size = 0x2000, scoped, tag = 'input window, operand 0']
    #allocation3 [shape = 's32[2]{0}', space=sflag, size = 0x8, scoped, tag = 'scoped memory for tpu_custom_call.1']
    #allocation4 [shape = 's32[2]{0}', space=sflag, size = 0x8, scoped, tag = 'scoped memory for tpu_custom_call.1']
    #allocation5 [shape = 'u8[512]{0}', space=vmem, size = 0x400, scoped, tag = 'input window, operand 1, single buffered']
    #allocation6 [shape = 's32[1]{0}', space=sflag, size = 0x4, scoped, tag = 'scoped memory for tpu_custom_call.1']
    #allocation7 [shape = 'u8[8192]{0}', space=vmem, size = 0x2000, scoped, tag = 'output window, operand 0']
    %8 = vsyncpa [#allocation3], 0
    %s9 = scalar_lea.sflag [#allocation3], 1
    %10 = vsyncpa %s9, 0
    %11 = vsyncpa [#allocation6], 0
    %12 = vsyncpa [#allocation4], 0
    %s13 = scalar_lea.sflag [#allocation4], 1
    %14 = vsyncpa %s13, 0
    loop: start=0, step=1, limit=4
    $region2: #{tpu_custom_call.1} parent=1 // loop_pre_header
      _
    $region3: #{tpu_custom_call.1} parent=1 // loop_header
      %s16 = sphi 0, %s20
      %p17 = scmp.ge.s32.totalorder %s16, 4
      %s26 = sphi 0, %s28
      %s29 = sphi 0, %s26
      %s30 = sphi 0, %s29
      %s46 = sphi 0, %s30
      %s50 = sphi 0, %s50
      %s52 = sphi 0, %s50
      %s53 = sphi 0, %s52
      %s67 = sphi 0, %s53
      %s71 = sphi 0, %s71
      %s73 = sphi 0, %s71
      %s74 = sphi 0, %s73
      %s88 = sphi 0, %s74
      %s94 = sphi 0, %s96
      %s97 = sphi 0, %s94
      %s98 = sphi 0, %s97
      %s114 = sphi 0, %s98
    $region4: #{tpu_custom_call.1} parent=1 // loop_header_branch
      %19 = sbr.rel (%p17) target = $region8
    $region5: #{tpu_custom_call.1} parent=1 // loop_body
      %s21 = ssub.s32 %s16, 1
      %s22 = ssub.s32 %s16, 2
      %s23 = sadd.s32 %s16, 1
      %s24 = ssub.s32 %s16, %s23
      %p25 = scmp.eq.s32.totalorder %s24, 0
      %s27 = sadd.s32 %s26, 1
      %s28 = scalar_select %p25, %s26, %s27
      %p31 = pneg %p25
      %p32 = scmp.eq.s32.totalorder %s16, 1
      %p33 = por %p31, %p32
      %p34 = scmp.ne.s32.totalorder %s26, %s29
      %p35 = scmp.eq.s32.totalorder %s16, 0
      %p36 = por %p34, %p35
      %p37 = scmp.ne.s32.totalorder %s26, %s29
      %p38 = scmp.eq.s32.totalorder %s21, 1
      %p39 = por %p37, %p38
      %p40 = scmp.ne.s32.totalorder %s29, %s30
      %p41 = scmp.eq.s32.totalorder %s21, 0
      %p42 = por %p40, %p41
      %p43 = scmp.ne.s32.totalorder %s29, %s30
      %p44 = scmp.eq.s32.totalorder %s22, 1
      %p45 = por %p43, %p44
      %p47 = scmp.ne.s32.totalorder %s30, %s46
      %p48 = scmp.eq.s32.totalorder %s22, 0
      %p49 = por %p47, %p48
      %s51 = sadd.s32 %s50, 1
      %p54 = scmp.eq.s32.totalorder %s16, 1
      %p55 = scmp.ne.s32.totalorder %s50, %s52
      %p56 = scmp.eq.s32.totalorder %s16, 0
      %p57 = por %p55, %p56
      %p58 = scmp.ne.s32.totalorder %s50, %s52
      %p59 = scmp.eq.s32.totalorder %s21, 1
      %p60 = por %p58, %p59
      %p61 = scmp.ne.s32.totalorder %s52, %s53
      %p62 = scmp.eq.s32.totalorder %s21, 0
      %p63 = por %p61, %p62
      %p64 = scmp.ne.s32.totalorder %s52, %s53
      %p65 = scmp.eq.s32.totalorder %s22, 1
      %p66 = por %p64, %p65
      %p68 = scmp.ne.s32.totalorder %s53, %s67
      %p69 = scmp.eq.s32.totalorder %s22, 0
      %p70 = por %p68, %p69
      %s72 = sadd.s32 %s71, 1
      %p75 = scmp.eq.s32.totalorder %s16, 1
      %p76 = scmp.ne.s32.totalorder %s71, %s73
      %p77 = scmp.eq.s32.totalorder %s16, 0
      %p78 = por %p76, %p77
      %p79 = scmp.ne.s32.totalorder %s71, %s73
      %p80 = scmp.eq.s32.totalorder %s21, 1
      %p81 = por %p79, %p80
      %p82 = scmp.ne.s32.totalorder %s73, %s74
      %p83 = scmp.eq.s32.totalorder %s21, 0
      %p84 = por %p82, %p83
      %p85 = scmp.ne.s32.totalorder %s73, %s74
      %p86 = scmp.eq.s32.totalorder %s22, 1
      %p87 = por %p85, %p86
      %p89 = scmp.ne.s32.totalorder %s74, %s88
      %p90 = scmp.eq.s32.totalorder %s22, 0
      %p91 = por %p89, %p90
      %s92 = ssub.s32 %s16, %s23
      %p93 = scmp.eq.s32.totalorder %s92, 0
      %s95 = sadd.s32 %s94, 1
      %s96 = scalar_select %p93, %s94, %s95
      %p99 = pneg %p93
      %p100 = scmp.eq.s32.totalorder %s16, 1
      %p101 = por %p99, %p100
      %p102 = scmp.ne.s32.totalorder %s94, %s97
      %p103 = scmp.eq.s32.totalorder %s16, 0
      %p104 = por %p102, %p103
      %p105 = scmp.ne.s32.totalorder %s94, %s97
      %p106 = scmp.eq.s32.totalorder %s21, 1
      %p107 = por %p105, %p106
      %p108 = scmp.ne.s32.totalorder %s97, %s98
      %p109 = scmp.eq.s32.totalorder %s21, 0
      %p110 = por %p108, %p109
      %p111 = scmp.ne.s32.totalorder %s97, %s98
      %p112 = scmp.eq.s32.totalorder %s22, 1
      %p113 = por %p111, %p112
      %p115 = scmp.ne.s32.totalorder %s98, %s114
      %p116 = scmp.eq.s32.totalorder %s22, 0
      %p117 = por %p115, %p116
      %p118 = scmp.le.s32.totalorder 1, %s16
      %p119 = scmp.lt.s32.totalorder %s16, 3
      %p120 = pnand %p118, %p119
      %p121 = pneg %p120
      // Predicated region
      $region9: #{tpu_custom_call.1} parent=5 // pred_check
        _
      $region10: #{tpu_custom_call.1} parent=5 // pred_check_branch
        %123 = sbr.rel (%p120) target = $region12
      $region11: #{tpu_custom_call.1} parent=5 // pred_region
        %s124 = ssub.s32 %s16, 1
        // Predicated region
        $region13: #{tpu_custom_call.1} parent=11 // pred_check
          %p125 = pneg %p63
        $region14: #{tpu_custom_call.1} parent=11 // pred_check_branch
          %127 = sbr.rel (%p125) target = $region16
        $region15: #{tpu_custom_call.1} parent=11 // pred_region
          %129 = vsyncadd [#allocation6], 0
          %s131 = sshll.u32 %s1, 4
          %s132 = int_to_ptr.hbm [resolvable:$true] %s131
          %s133 = sshll.u32 [#allocation5], 4
          %s134 = int_to_ptr.vmem [resolvable:$true] %s133
          %136 = dma.hbm_to_vmem [thread:$0]  %s132, 16, %s134, [#allocation6]
        $region16: #{tpu_custom_call.1} parent=11 // pred_fallthru
          _
        // Predicated region
        $region17: #{tpu_custom_call.1} parent=11 // pred_check
          %p137 = pneg %p84
        $region18: #{tpu_custom_call.1} parent=11 // pred_check_branch
          %139 = sbr.rel (%p137) target = $region20
        $region19: #{tpu_custom_call.1} parent=11 // pred_region
          _
        $region20: #{tpu_custom_call.1} parent=11 // pred_fallthru
          _
      $region12: #{tpu_custom_call.1} parent=5 // pred_fallthru
        _
      %p140 = scmp.lt.s32.totalorder %s16, 2
      // Predicated region
      $region21: #{tpu_custom_call.1} parent=5 // pred_check
        %p141 = pneg %p140
      $region22: #{tpu_custom_call.1} parent=5 // pred_check_branch
        %143 = sbr.rel (%p141) target = $region24
      $region23: #{tpu_custom_call.1} parent=5 // pred_region
        // Predicated region
        $region25: #{tpu_custom_call.1} parent=23 // pred_check
          %p144 = pneg %p36
        $region26: #{tpu_custom_call.1} parent=23 // pred_check_branch
          %146 = sbr.rel (%p144) target = $region28
        $region27: #{tpu_custom_call.1} parent=23 // pred_region
          %s147 = sand.u32 %s26, 1
          %s148 = scalar_lea.sflag [#allocation3], %s147
          %s149 = sand.u32 %s26, 1
          %s150 = smul.addr %s149, 8
          %s151 = scalar_lea.vmem [#allocation2], %s150
          %153 = vsyncadd %s148, 0
          %s154 = smul.addr %s16, 8
          %s155 = scalar_lea.hbm %s0, %s154
          %s157 = sshll.u32 %s155, 4
          %s158 = int_to_ptr.hbm [resolvable:$true] %s157
          %s159 = sshll.u32 %s151, 4
          %s160 = int_to_ptr.vmem [resolvable:$true] %s159
          %162 = dma.hbm_to_vmem [thread:$0]  %s158, 128, %s160, %s148
        $region28: #{tpu_custom_call.1} parent=23 // pred_fallthru
          _
      $region24: #{tpu_custom_call.1} parent=5 // pred_fallthru
        _
      %p163 = scmp.le.s32.totalorder 1, %s16
      %p164 = scmp.lt.s32.totalorder %s16, 3
      %p165 = pnand %p163, %p164
      %p166 = pneg %p165
      // Predicated region
      $region29: #{tpu_custom_call.1} parent=5 // pred_check
        _
      $region30: #{tpu_custom_call.1} parent=5 // pred_check_branch
        %168 = sbr.rel (%p165) target = $region32
      $region31: #{tpu_custom_call.1} parent=5 // pred_region
        %s169 = ssub.s32 %s16, 1
        %s170 = sand.u32 %s29, 1
        %s171 = scalar_lea.sflag [#allocation3], %s170
        %s172 = sand.u32 %s29, 1
        %s173 = smul.addr %s172, 8
        %s174 = scalar_lea.vmem [#allocation2], %s173
        // Predicated region
        $region33: #{tpu_custom_call.1} parent=31 // pred_check
          %p175 = pneg %p42
        $region34: #{tpu_custom_call.1} parent=31 // pred_check_branch
          %177 = sbr.rel (%p175) target = $region36
        $region35: #{tpu_custom_call.1} parent=31 // pred_region
          %179 = dma.done %s171, 128
        $region36: #{tpu_custom_call.1} parent=31 // pred_fallthru
          _
        // Predicated region
        $region37: #{tpu_custom_call.1} parent=31 // pred_check
          %p180 = pneg %p63
        $region38: #{tpu_custom_call.1} parent=31 // pred_check_branch
          %182 = sbr.rel (%p180) target = $region40
        $region39: #{tpu_custom_call.1} parent=31 // pred_region
          %184 = dma.done [#allocation6], 16
        $region40: #{tpu_custom_call.1} parent=31 // pred_fallthru
          _
        %s185 = sand.u32 %s29, 1
        %s186 = scalar_lea.sflag [#allocation3], %s185
        %s187 = sand.u32 %s29, 1
        %s188 = smul.addr %s187, 8
        %s189 = scalar_lea.vmem [#allocation2], %s188
        %p190 = pneg %p42
        %p191 = pneg %p39
        %p192 = pneg %p63
        %p193 = pneg %p60
        %p194 = pneg %p84
        %p195 = pneg %p81
        %p196 = pneg %p110
        %p197 = pneg %p107
        %s198 = sand.u32 %s97, 1
        %s199 = scalar_lea.sflag [#allocation4], %s198
        %s200 = sand.u32 %s97, 1
        %s201 = smul.addr %s200, 8
        %s202 = scalar_lea.vmem [#allocation7], %s201
        %v203 = vld [vmem:[%s174] sm:$0xff]
        %vm204 = vcmask 261120
        %v205 = vsel %vm204, %v203, 0.0
        %206 = vadd.xlane.f32.xlu0 %v205
        %v207 = vpop.xlane.xlu0 %206
        %v208 = vmul.f32 %v203, %v203
        %v209 = vsel %vm204, %v208, 0.0
        %210 = vadd.xlane.f32.xlu0 %v209
        %v211 = vpop.xlane.xlu0 %210
        %v212 = vmul.f32 %v207, 0.03125
        %v213 = vmul.f32 %v207, %v212
        %v214 = vsub.f32 %v211, %v213
        %v215 = vrcp.pop 31.0
        %v216 = vmul.f32 31.0, %v215
        %v217 = vsub.f32 1.0, %v216
        %v218 = vmul.f32 %v215, %v217
        %v219 = vadd.f32 %v215, %v218
        %vm220 = vweird.f32 %v215
        %v221 = vsel %vm220, %v215, %v219
        %v222 = vmul.f32 %v214, %v221
        %v223 = vmax.f32 %v222, 0.0
        %v224 = vrsqrt.pop %v223
        %v225 = vmul.f32 %v224, %v223
        %v226 = vmul.f32 %v225, %v224
        %v227 = vmul.f32 0.5, %v226
        %v228 = vsub.f32 1.5, %v227
        %v229 = vmul.f32 %v224, %v228
        %v230 = vmul.f32 %v223, %v229
        %vm231 = vcmp.eq.f32.partialorder %v223, inf
        %v232 = vsel %vm231, %v223, %v230
        %vm233 = vcmp.eq.f32.partialorder %v223, 0.0
        %v234 = vand.u32 %v223, 2147483648
        %v235 = vsel %vm233, %v234, %v232
        %v236 = vsub.f32 %v203, %v212
        %v237 = vld [vmem:[#allocation5] sm:$0x1]
        %v238 = vld [vmem:[%s2] sm:$0x1]
        %v239 = vadd.f32 %v235, 1e-06
        %v241 = vperm.slane %v238, 0
        %v243 = vadd.f32 %v239, %v241
        %v245 = vperm.slane %v237, 0
        %v247 = vmul.f32 %v245, %v236
        %v248 = vrcp.pop %v243
        %v249 = vmul.f32 %v243, %v248
        %v250 = vsub.f32 1.0, %v249
        %v251 = vmul.f32 %v248, %v250
        %v252 = vadd.f32 %v248, %v251
        %vm253 = vweird.f32 %v243
        %vm254 = vweird.f32 %v248
        %vm255 = vmor %vm253, %vm254
        %v256 = vsel %vm255, %v248, %v252
        %v257 = vand.u32 2147483647, %v243
        %vm258 = vcmp.eq.f32.partialorder %v257, 8.507059e+37
        %v259 = vand.u32 %v243, 2147483648
        %v260 = vor.u32 1.1754944e-38, %v259
        %v261 = vsel %vm258, %v260, %v256
        %v262 = vmul.f32 %v247, %v261
        %263 = vst.msk [vmem:[%s202] sm:$0xff] %vm204, %v262
        %s264 = sand.u32 %s97, 1
        %s265 = scalar_lea.sflag [#allocation4], %s264
        %s266 = sand.u32 %s97, 1
        %s267 = smul.addr %s266, 8
        %s268 = scalar_lea.vmem [#allocation7], %s267
        // Predicated region
        $region41: #{tpu_custom_call.1} parent=31 // pred_check
          %p269 = pneg %p107
        $region42: #{tpu_custom_call.1} parent=31 // pred_check_branch
          %271 = sbr.rel (%p269) target = $region44
        $region43: #{tpu_custom_call.1} parent=31 // pred_region
          %273 = vsyncadd %s265, 0
          %s274 = smul.addr %s21, 8
          %s275 = scalar_lea.hbm %s3, %s274
          %s277 = sshll.u32 %s268, 4
          %s278 = int_to_ptr.vmem [resolvable:$true] %s277
          %s279 = sshll.u32 %s275, 4
          %s280 = int_to_ptr.hbm [resolvable:$true] %s279
          %282 = dma.vmem_to_hbm [thread:$0]  %s278, 128, %s280, %s265
        $region44: #{tpu_custom_call.1} parent=31 // pred_fallthru
          _
      $region32: #{tpu_custom_call.1} parent=5 // pred_fallthru
        _
      %p283 = scmp.le.s32.totalorder 2, %s16
      // Predicated region
      $region45: #{tpu_custom_call.1} parent=5 // pred_check
        %p284 = pneg %p283
      $region46: #{tpu_custom_call.1} parent=5 // pred_check_branch
        %286 = sbr.rel (%p284) target = $region48
      $region47: #{tpu_custom_call.1} parent=5 // pred_region
        %s287 = ssub.s32 %s16, 2
        // Predicated region
        $region49: #{tpu_custom_call.1} parent=47 // pred_check
          %p288 = pneg %p113
        $region50: #{tpu_custom_call.1} parent=47 // pred_check_branch
          %290 = sbr.rel (%p288) target = $region52
        $region51: #{tpu_custom_call.1} parent=47 // pred_region
          %s291 = sand.u32 %s98, 1
          %s292 = scalar_lea.sflag [#allocation4], %s291
          %s293 = sand.u32 %s98, 1
          %s294 = smul.addr %s293, 8
          %s295 = scalar_lea.vmem [#allocation7], %s294
          %297 = dma.done %s292, 128
        $region52: #{tpu_custom_call.1} parent=47 // pred_fallthru
          _
      $region48: #{tpu_custom_call.1} parent=5 // pred_fallthru
        _
    $region6: #{tpu_custom_call.1} parent=1 // loop_footer
      %s20 = sadd.s32 1, %s16
    $region7: #{tpu_custom_call.1} parent=1 // loop_footer_branch
      %15 = sbr.rel target = $region3
    $region8: #{tpu_custom_call.1} parent=1 // loop_exit
      _
    %298 = vsyncpa [#allocation3], 1
    %s299 = scalar_lea.sflag [#allocation3], 1
    %300 = vsyncpa %s299, 1
    %301 = vsyncpa [#allocation6], 1
    %302 = vsyncpa [#allocation4], 1
    %s303 = scalar_lea.sflag [#allocation4], 1
    %304 = vsyncpa %s303, 1

</llo_original>
